<compile_context>
chip_gen: v7x
topology: tpu7x:2x2x1
jax: 0.10.0
libtpu: 0.0.40
codegen_flags: <defaults>
</compile_context>

<pallas_src>
import jax
import jax.numpy as jnp
from jax.experimental import pallas as pl
from jax.experimental.pallas import tpu as pltpu


# ---------------------------------------------------------------------------
# Constants / planning helpers
# ---------------------------------------------------------------------------

_LANE = 128
_SUB = 8
_VREG = _SUB * _LANE                    # 1024 f32 elements per (8,128) block
_PILLAR_TILE_PREF = 512                 # (8,128) blocks per grid step -> 2 MiB/input/buffer
_PILLAR_VMEM_LIMIT = 32 << 20           # 6 inputs x 2 bufs x 2 MiB = 24 MiB (< 32 MiB everywhere)
_CORE_SPLITS = 2                        # leading "parallel" axis; lets v7x's 2 TCs split the work
_BCE_PRED_PAD = -1.0e30                 # padded logit -> BCE contribution is exactly 0 (target 0)


def _cdiv(a, b):
    return -(-a // b)


def _plan_reduction(total_blocks, tile_pref, core_splits=_CORE_SPLITS):
    """Plan a (cores, steps) reduction grid over `total_blocks` unit blocks.

    Returns (tile, cores, steps, padded_blocks) with:
      * tile <= tile_pref                      (per-step VMEM bounded by the budget)
      * cores * steps * tile == padded_blocks  (>= total_blocks, minimal padding)
    """
    total_blocks = max(int(total_blocks), 1)
    tile = max(1, min(int(tile_pref), total_blocks))
    cores = core_splits if total_blocks >= 2 * tile else 1
    steps = max(1, _cdiv(total_blocks, cores * tile))
    tile = _cdiv(total_blocks, cores * steps)        # rebalance -> minimal tail padding
    padded_blocks = cores * steps * tile
    return tile, cores, steps, padded_blocks


def _kd_budgets():
    """Per-input block budget / scoped-VMEM limit for the KD pass, per chip generation."""
    budget, vmem_limit = 4 << 20, 32 << 20           # safe on v7x (64 MiB physical VMEM)
    try:
        if pltpu.get_tpu_info().vmem_capacity_bytes >= (96 << 20):   # v5e / v6e (128 MiB)
            budget, vmem_limit = 8 << 20, 64 << 20
    except Exception:
        pass                                          # conservative defaults if probe unavailable
    return budget, vmem_limit


# ---------------------------------------------------------------------------
# Pillar-loss kernels (BCE-with-logits + smooth-L1), row-tiled reductions
# ---------------------------------------------------------------------------

def _bce_rows(x_ref, z_ref):
    x = x_ref[...].astype(jnp.float32)                # (tile, 8, 128)
    z = z_ref[...].astype(jnp.float32)
    bce = jnp.maximum(x, 0.0) - x * z + jnp.log1p(jnp.exp(-jnp.abs(x)))
    return jnp.sum(bce, axis=0)                       # (8, 128) VPU adds


def _smooth_l1_rows(p_ref, t_ref):
    d = p_ref[...].astype(jnp.float32) - t_ref[...].astype(jnp.float32)
    ad = jnp.abs(d)
    return jnp.sum(jnp.where(ad < 1.0, 0.5 * d * d, ad - 0.5), axis=0)


def _fused_pillar_kernel(op_ref, og_ref, dp_ref, dg_ref, np_ref, ng_ref, out_ref):
    # out_ref: (1, 3, 8, 128) per-core accumulator, resident across the "arbitrary" axis.
    @pl.when(pl.program_id(1) == 0)
    def _():
        out_ref[...] = jnp.zeros_like(out_ref)

    out_ref[0, 0] = out_ref[0, 0] + _bce_rows(op_ref, og_ref)        # occupancy (BCE w/ logits)
    out_ref[0, 1] = out_ref[0, 1] + _smooth_l1_rows(dp_ref, dg_ref)  # density  (smooth L1)
    out_ref[0, 2] = out_ref[0, 2] + _smooth_l1_rows(np_ref, ng_ref)  # number   (smooth L1)


def _bce_pair_kernel(x_ref, z_ref, out_ref):
    @pl.when(pl.program_id(1) == 0)
    def _():
        out_ref[...] = jnp.zeros_like(out_ref)
    out_ref[0, 0] = out_ref[0, 0] + _bce_rows(x_ref, z_ref)


def _smooth_l1_pair_kernel(p_ref, t_ref, out_ref):
    @pl.when(pl.program_id(1) == 0)
    def _():
        out_ref[...] = jnp.zeros_like(out_ref)
    out_ref[0, 0] = out_ref[0, 0] + _smooth_l1_rows(p_ref, t_ref)


def _tiled_pair_sums(kernel, arrays, pad_values, out_rows):
    """Stream same-shape arrays as lane-dense (blocks, 8, 128) tiles through `kernel`,
    accumulating per-core (out_rows, 8, 128) partials; returns (out_rows,) sums."""
    numel = int(arrays[0].size)
    blocks = _cdiv(numel, _VREG)
    tile, cores, steps, padded_blocks = _plan_reduction(blocks, _PILLAR_TILE_PREF)
    padded = padded_blocks * _VREG

    ins = []
    for a, pv in zip(arrays, pad_values):
        flat = a.reshape(-1)
        if flat.dtype != jnp.float32:
            flat = flat.astype(jnp.float32)           # keep native f32 (8,128) tiling in-kernel
        if padded != numel:
            flat = jnp.pad(flat, (0, padded - numel), constant_values=pv)
        ins.append(flat.reshape(padded_blocks, _SUB, _LANE))

    in_map = lambda c, g: (c * steps + g, 0, 0)
    acc = pl.pallas_call(
        kernel,
        out_shape=jax.ShapeDtypeStruct((cores, out_rows, _SUB, _LANE), jnp.float32),
        grid_spec=pltpu.PrefetchScalarGridSpec(
            num_scalar_prefetch=0,
            grid=(cores, steps),
            in_specs=[pl.BlockSpec((tile, _SUB, _LANE), in_map)] * len(ins),
            out_specs=pl.BlockSpec((1, out_rows, _SUB, _LANE), lambda c, g: (c, 0, 0, 0)),
        ),
        compiler_params=pltpu.CompilerParams(
            dimension_semantics=("parallel", "arbitrary"),
            vmem_limit_bytes=_PILLAR_VMEM_LIMIT),
    )(*ins)
    # One tiny cross-core / cross-lane reduce in the wrapper (kept here for robustness;
    # it is a single small XLA op on a (cores, out_rows, 8, 128) array).
    return jnp.sum(acc, axis=(0, 2, 3))


# ---------------------------------------------------------------------------
# KD (KLDiv of channel softmaxes) — spatial axis tiled on lanes, C reduced in-kernel
# ---------------------------------------------------------------------------

def _kd_kl_kernel(s_ref, t_ref, out_ref):
    # s_ref/t_ref: (N, C, hw_tile); out_ref: (1, C, hw_tile) per-core accumulator.
    @pl.when(pl.program_id(1) == 0)
    def _():
        out_ref[...] = jnp.zeros_like(out_ref)

    s = s_ref[...].astype(jnp.float32)
    t = t_ref[...].astype(jnp.float32)

    # student log_softmax over channels (sublane axis)
    s_shift = s - jnp.max(s, axis=1, keepdims=True)
    s_log = s_shift - jnp.log(jnp.sum(jnp.exp(s_shift), axis=1, keepdims=True))

    # teacher softmax + log_softmax over channels, sharing one full-array exp.
    t_shift = t - jnp.max(t, axis=1, keepdims=True)
    t_exp = jnp.exp(t_shift)
    denom = jnp.sum(t_exp, axis=1, keepdims=True)     # (N, 1, hw_tile)
    t_log = t_shift - jnp.log(denom)
    t_sm = t_exp / denom                              # exact divide (no approx-recip bias)

    kl = t_sm * (t_log - s_log)                       # (N, C, hw_tile); t_sm > 0, no 0*log0
    out_ref[0] = out_ref[0] + jnp.sum(kl, axis=0)     # steady state: pure VPU adds


def _kd_kl_sum(student, teacher):
    N, C, H, W = teacher.shape
    HW = H * W
    # NCHW -> (N, C, H*W): contiguous reshape, no transpose, HW lands on lanes.
    s3 = student.reshape(N, C, HW)
    t3 = teacher.reshape(N, C, HW)

    budget, vmem_limit = _kd_budgets()
    bytes_per_lane_block = N * C * _LANE * 4          # f32 per 128-lane column group, per input
    tile_pref = max(1, budget // bytes_per_lane_block)
    blocks = _cdiv(HW, _LANE)
    tile, cores, steps, padded_blocks = _plan_reduction(blocks, tile_pref)
    hw_tile = tile * _LANE
    padded_hw = padded_blocks * _LANE
    if padded_hw != HW:
        pad = padded_hw - HW
        # Zero-padded columns give identical uniform student/teacher softmaxes -> KL == 0.
        s3 = jnp.pad(s3, ((0, 0), (0, 0), (0, pad)))
        t3 = jnp.pad(t3, ((0, 0), (0, 0), (0, pad)))

    in_map = lambda c, g: (0, 0, c * steps + g)
    acc = pl.pallas_call(
        _kd_kl_kernel,
        out_shape=jax.ShapeDtypeStruct((cores, C, hw_tile), jnp.float32),
        grid_spec=pltpu.PrefetchScalarGridSpec(
            num_scalar_prefetch=0,
            grid=(cores, steps),
            in_specs=[pl.BlockSpec((N, C, hw_tile), in_map),
                      pl.BlockSpec((N, C, hw_tile), in_map)],
            out_specs=pl.BlockSpec((1, C, hw_tile), lambda c, g: (c, 0, 0)),
        ),
        compiler_params=pltpu.CompilerParams(
            dimension_semantics=("parallel", "arbitrary"),
            vmem_limit_bytes=vmem_limit),
    )(s3, t3)
    # Final tiny cross-core / cross-lane reduce happens once, outside the hot loop.
    return jnp.sum(acc)


# ---------------------------------------------------------------------------
# Forward (mirrors MaeReconstructionLoss.forward)
# ---------------------------------------------------------------------------

def mae_reconstruction_loss(output_dict,
                            occupancy_weight=None,
                            density_weight=None,
                            number_weight=None,
                            kd=None):
    loss_dict = {}
    total_loss = jnp.float32(0.0)

    fused = bool(occupancy_weight) and bool(density_weight) and bool(number_weight)
    if fused:
        op = output_dict['pred_pillar_occupancy']
        og = output_dict['gt_pillar_occupancy']
        dp = output_dict['pred_pillar_points_density']
        dg = output_dict['gt_pillar_points_density']
        npred = output_dict['pred_pillar_points_number']
        ng = output_dict['gt_pillar_points_number']
        fused = (op.shape == og.shape == dp.shape == dg.shape == npred.shape == ng.shape)

    if fused:
        sums = _tiled_pair_sums(
            _fused_pillar_kernel,
            [op, og, dp, dg, npred, ng],
            [_BCE_PRED_PAD, 0.0, 0.0, 0.0, 0.0, 0.0],
            out_rows=3)
        occupied_loss = sums[0] / op.size / op.shape[0] * occupancy_weight
        density_loss = sums[1] / dp.size / dp.shape[0] * density_weight
        number_loss = sums[2] / npred.size / npred.shape[0] * number_weight
        loss_dict['occupied_loss'] = occupied_loss
        loss_dict['density_loss'] = density_loss
        loss_dict['number_loss'] = number_loss
        total_loss = total_loss + occupied_loss + density_loss + number_loss
    else:
        if occupancy_weight:
            pred = output_dict['pred_pillar_occupancy']
            gt = output_dict['gt_pillar_occupancy']
            bce_sum = _tiled_pair_sums(_bce_pair_kernel, [pred, gt],
                                       [_BCE_PRED_PAD, 0.0], out_rows=1)[0]
            occupied_loss = bce_sum / pred.size / pred.shape[0] * occupancy_weight
            loss_dict['occupied_loss'] = occupied_loss
            total_loss = total_loss + occupied_loss
        if density_weight:
            pred = output_dict['pred_pillar_points_density']
            gt = output_dict['gt_pillar_points_density']
            l1_sum = _tiled_pair_sums(_smooth_l1_pair_kernel, [pred, gt],
                                      [0.0, 0.0], out_rows=1)[0]
            density_loss = l1_sum / pred.size / pred.shape[0] * density_weight
            loss_dict['density_loss'] = density_loss
            total_loss = total_loss + density_loss
        if number_weight:
            pred = output_dict['pred_pillar_points_number']
            gt = output_dict['gt_pillar_points_number']
            l1_sum = _tiled_pair_sums(_smooth_l1_pair_kernel, [pred, gt],
                                      [0.0, 0.0], out_rows=1)[0]
            number_loss = l1_sum / pred.size / pred.shape[0] * number_weight
            loss_dict['number_loss'] = number_loss
            total_loss = total_loss + number_loss

    if kd:
        student_feature = output_dict['encode_features']          # NCHW
        teacher_feature = output_dict['teacher_encode_features']  # NCHW
        N, C, H, W = teacher_feature.shape
        kl_sum = _kd_kl_sum(student_feature, teacher_feature)
        kd_loss = kl_sum / (N * C * H * W)    # KLDivLoss(size_average=True) => elementwise mean
        # TODO(synk): decoder_kd path softmaxes over a size-1 dim => KL is identically zero;
        # not materialized as a kernel.
        kd_loss = kd_loss * kd['weight']
        loss_dict['kd_loss'] = kd_loss
        total_loss = total_loss + kd_loss

    loss_dict['total_loss'] = total_loss
    return total_loss, loss_dict


# ---------------------------------------------------------------------------
# Driver
# ---------------------------------------------------------------------------

if __name__ == "__main__":
    key = jax.random.PRNGKey(0)
    k = jax.random.split(key, 8)

    B, H, W = 2, 32, 32            # pillar occupancy / density / number maps
    N, C, FH, FW = 2, 32, 16, 64   # encode features (NCHW)

    output_dict = {
        'pred_pillar_occupancy': jax.random.normal(k[0], (B, H, W), jnp.float32),
        'gt_pillar_occupancy': (jax.random.uniform(k[1], (B, H, W)) > 0.5).astype(jnp.float32),
        'pred_pillar_points_density': jax.random.normal(k[2], (B, H, W), jnp.float32),
        'gt_pillar_points_density': jax.random.normal(k[3], (B, H, W), jnp.float32) * 2.0,
        'pred_pillar_points_number': jax.random.normal(k[4], (B, H, W), jnp.float32) * 3.0,
        'gt_pillar_points_number': jax.random.normal(k[5], (B, H, W), jnp.float32),
        'encode_features': jax.random.normal(k[6], (N, C, FH, FW), jnp.float32),
        'teacher_encode_features': jax.random.normal(k[7], (N, C, FH, FW), jnp.float32),
    }

    total_loss, loss_dict = mae_reconstruction_loss(
        output_dict,
        occupancy_weight=1.0,
        density_weight=1.0,
        number_weight=0.5,
        kd={'weight': 0.5},
    )
    jax.block_until_ready(total_loss)
    print("KERNEL_OK")
</pallas_src>

<mosaic_0001>
module attributes {stable_mosaic.version = 11 : i64} {
  func.func @_fused_pillar_kernel(%arg0: i32, %arg1: i32, %arg2: memref<2x8x128xf32, #tpu.memory_space<vmem>>, %arg3: memref<2x8x128xf32, #tpu.memory_space<vmem>>, %arg4: memref<2x8x128xf32, #tpu.memory_space<vmem>>, %arg5: memref<2x8x128xf32, #tpu.memory_space<vmem>>, %arg6: memref<2x8x128xf32, #tpu.memory_space<vmem>>, %arg7: memref<2x8x128xf32, #tpu.memory_space<vmem>>, %arg8: memref<1x3x8x128xf32, #tpu.memory_space<vmem>>) attributes {dimension_semantics = [#tpu.dimension_semantics<parallel>, #tpu.dimension_semantics<arbitrary>], iteration_bounds = array<i64: 1, 1>, scalar_prefetch = 0 : i64, scratch_operands = 0 : i64, tpu.core_type = #tpu.core_type<tc>, window_params = [{transform_indices = @transform_0, window_bounds = array<i64: 2, 8, 128>}, {transform_indices = @transform_1, window_bounds = array<i64: 2, 8, 128>}, {transform_indices = @transform_2, window_bounds = array<i64: 2, 8, 128>}, {transform_indices = @transform_3, window_bounds = array<i64: 2, 8, 128>}, {transform_indices = @transform_4, window_bounds = array<i64: 2, 8, 128>}, {transform_indices = @transform_5, window_bounds = array<i64: 2, 8, 128>}, {transform_indices = @transform_6, window_bounds = array<i64: 1, 3, 8, 128>}]} {
    %c0_i32 = arith.constant 0 : i32
    %0 = arith.cmpi eq, %arg1, %c0_i32 : i32
    %1 = arith.extui %0 : i1 to i32
    %c0_i32_0 = arith.constant 0 : i32
    %2 = arith.cmpi ne, %1, %c0_i32_0 : i32
    scf.if %2 {
      %cst_50 = arith.constant 0.000000e+00 : f32
      %60 = vector.broadcast %cst_50 : f32 to vector<1x3x8x128xf32>
      %c0_51 = arith.constant 0 : index
      %c0_52 = arith.constant 0 : index
      %c0_53 = arith.constant 0 : index
      %c0_54 = arith.constant 0 : index
      %61 = vector.load %arg8[%c0_51, %c0_52, %c0_53, %c0_54] : memref<1x3x8x128xf32, #tpu.memory_space<vmem>>, vector<1x3x8x128xf32>
      tpu.vector_store %arg8[%c0_51, %c0_52, %c0_53, %c0_54], %60 {strides = array<i32>} : memref<1x3x8x128xf32, #tpu.memory_space<vmem>>, vector<1x3x8x128xf32>,
    } else {
    }
    %c0 = arith.constant 0 : index
    %c0_1 = arith.constant 0 : index
    %c0_2 = arith.constant 0 : index
    %c0_3 = arith.constant 0 : index
    %3 = vector.load %arg8[%c0, %c0_1, %c0_2, %c0_3] : memref<1x3x8x128xf32, #tpu.memory_space<vmem>>, vector<1x1x8x128xf32>
    %4 = vector.shape_cast %3 : vector<1x1x8x128xf32> to vector<8x128xf32>
    %c0_4 = arith.constant 0 : index
    %c0_5 = arith.constant 0 : index
    %c0_6 = arith.constant 0 : index
    %5 = vector.load %arg2[%c0_4, %c0_5, %c0_6] : memref<2x8x128xf32, #tpu.memory_space<vmem>>, vector<2x8x128xf32>
    %c0_7 = arith.constant 0 : index
    %c0_8 = arith.constant 0 : index
    %c0_9 = arith.constant 0 : index
    %6 = vector.load %arg3[%c0_7, %c0_8, %c0_9] : memref<2x8x128xf32, #tpu.memory_space<vmem>>, vector<2x8x128xf32>
    %cst = arith.constant 0.000000e+00 : f32
    %7 = vector.broadcast %cst : f32 to vector<2x8x128xf32>
    %8 = arith.maximumf %5, %7 : vector<2x8x128xf32>
    %9 = arith.mulf %5, %6 : vector<2x8x128xf32>
    %10 = arith.subf %8, %9 : vector<2x8x128xf32>
    %11 = math.absf %5 : vector<2x8x128xf32>
    %cst_10 = arith.constant 0.000000e+00 : f32
    %12 = vector.broadcast %cst_10 : f32 to vector<2x8x128xf32>
    %13 = arith.subf %12, %11 : vector<2x8x128xf32>
    %14 = math.exp %13 : vector<2x8x128xf32>
    %15 = math.log1p %14 : vector<2x8x128xf32>
    %16 = arith.addf %10, %15 : vector<2x8x128xf32>
    %cst_11 = arith.constant dense<0.000000e+00> : vector<8x128xf32>
    %17 = vector.multi_reduction <add>, %16, %cst_11 [0] : vector<2x8x128xf32> to vector<8x128xf32>
    %18 = arith.addf %4, %17 : vector<8x128xf32>
    %c0_12 = arith.constant 0 : index
    %c0_13 = arith.constant 0 : index
    %c0_14 = arith.constant 0 : index
    %c0_15 = arith.constant 0 : index
    %19 = vector.load %arg8[%c0_12, %c0_13, %c0_14, %c0_15] : memref<1x3x8x128xf32, #tpu.memory_space<vmem>>, vector<1x1x8x128xf32>
    %20 = vector.shape_cast %19 : vector<1x1x8x128xf32> to vector<8x128xf32>
    %21 = vector.shape_cast %18 : vector<8x128xf32> to vector<1x1x8x128xf32>
    tpu.vector_store %arg8[%c0_12, %c0_13, %c0_14, %c0_15], %21 {strides = array<i32>} : memref<1x3x8x128xf32, #tpu.memory_space<vmem>>, vector<1x1x8x128xf32>,
    %c0_16 = arith.constant 0 : index
    %c1 = arith.constant 1 : index
    %c0_17 = arith.constant 0 : index
    %c0_18 = arith.constant 0 : index
    %22 = vector.load %arg8[%c0_16, %c1, %c0_17, %c0_18] : memref<1x3x8x128xf32, #tpu.memory_space<vmem>>, vector<1x1x8x128xf32>
    %23 = vector.shape_cast %22 : vector<1x1x8x128xf32> to vector<8x128xf32>
    %c0_19 = arith.constant 0 : index
    %c0_20 = arith.constant 0 : index
    %c0_21 = arith.constant 0 : index
    %24 = vector.load %arg4[%c0_19, %c0_20, %c0_21] : memref<2x8x128xf32, #tpu.memory_space<vmem>>, vector<2x8x128xf32>
    %c0_22 = arith.constant 0 : index
    %c0_23 = arith.constant 0 : index
    %c0_24 = arith.constant 0 : index
    %25 = vector.load %arg5[%c0_22, %c0_23, %c0_24] : memref<2x8x128xf32, #tpu.memory_space<vmem>>, vector<2x8x128xf32>
    %26 = arith.subf %24, %25 : vector<2x8x128xf32>
    %27 = math.absf %26 : vector<2x8x128xf32>
    %cst_25 = arith.constant 1.000000e+00 : f32
    %28 = vector.broadcast %cst_25 : f32 to vector<2x8x128xf32>
    %29 = arith.cmpf olt, %27, %28 : vector<2x8x128xf32>
    %cst_26 = arith.constant 5.000000e-01 : f32
    %30 = vector.broadcast %cst_26 : f32 to vector<2x8x128xf32>
    %31 = arith.mulf %30, %26 : vector<2x8x128xf32>
    %32 = arith.mulf %31, %26 : vector<2x8x128xf32>
    %cst_27 = arith.constant 5.000000e-01 : f32
    %33 = vector.broadcast %cst_27 : f32 to vector<2x8x128xf32>
    %34 = arith.subf %27, %33 : vector<2x8x128xf32>
    %35 = arith.select %29, %32, %34 : vector<2x8x128xi1>, vector<2x8x128xf32>
    %cst_28 = arith.constant dense<0.000000e+00> : vector<8x128xf32>
    %36 = vector.multi_reduction <add>, %35, %cst_28 [0] : vector<2x8x128xf32> to vector<8x128xf32>
    %37 = arith.addf %23, %36 : vector<8x128xf32>
    %c0_29 = arith.constant 0 : index
    %c1_30 = arith.constant 1 : index
    %c0_31 = arith.constant 0 : index
    %c0_32 = arith.constant 0 : index
    %38 = vector.load %arg8[%c0_29, %c1_30, %c0_31, %c0_32] : memref<1x3x8x128xf32, #tpu.memory_space<vmem>>, vector<1x1x8x128xf32>
    %39 = vector.shape_cast %38 : vector<1x1x8x128xf32> to vector<8x128xf32>
    %40 = vector.shape_cast %37 : vector<8x128xf32> to vector<1x1x8x128xf32>
    tpu.vector_store %arg8[%c0_29, %c1_30, %c0_31, %c0_32], %40 {strides = array<i32>} : memref<1x3x8x128xf32, #tpu.memory_space<vmem>>, vector<1x1x8x128xf32>,
    %c0_33 = arith.constant 0 : index
    %c2 = arith.constant 2 : index
    %c0_34 = arith.constant 0 : index
    %c0_35 = arith.constant 0 : index
    %41 = vector.load %arg8[%c0_33, %c2, %c0_34, %c0_35] : memref<1x3x8x128xf32, #tpu.memory_space<vmem>>, vector<1x1x8x128xf32>
    %42 = vector.shape_cast %41 : vector<1x1x8x128xf32> to vector<8x128xf32>
    %c0_36 = arith.constant 0 : index
    %c0_37 = arith.constant 0 : index
    %c0_38 = arith.constant 0 : index
    %43 = vector.load %arg6[%c0_36, %c0_37, %c0_38] : memref<2x8x128xf32, #tpu.memory_space<vmem>>, vector<2x8x128xf32>
    %c0_39 = arith.constant 0 : index
    %c0_40 = arith.constant 0 : index
    %c0_41 = arith.constant 0 : index
    %44 = vector.load %arg7[%c0_39, %c0_40, %c0_41] : memref<2x8x128xf32, #tpu.memory_space<vmem>>, vector<2x8x128xf32>
    %45 = arith.subf %43, %44 : vector<2x8x128xf32>
    %46 = math.absf %45 : vector<2x8x128xf32>
    %cst_42 = arith.constant 1.000000e+00 : f32
    %47 = vector.broadcast %cst_42 : f32 to vector<2x8x128xf32>
    %48 = arith.cmpf olt, %46, %47 : vector<2x8x128xf32>
    %cst_43 = arith.constant 5.000000e-01 : f32
    %49 = vector.broadcast %cst_43 : f32 to vector<2x8x128xf32>
    %50 = arith.mulf %49, %45 : vector<2x8x128xf32>
    %51 = arith.mulf %50, %45 : vector<2x8x128xf32>
    %cst_44 = arith.constant 5.000000e-01 : f32
    %52 = vector.broadcast %cst_44 : f32 to vector<2x8x128xf32>
    %53 = arith.subf %46, %52 : vector<2x8x128xf32>
    %54 = arith.select %48, %51, %53 : vector<2x8x128xi1>, vector<2x8x128xf32>
    %cst_45 = arith.constant dense<0.000000e+00> : vector<8x128xf32>
    %55 = vector.multi_reduction <add>, %54, %cst_45 [0] : vector<2x8x128xf32> to vector<8x128xf32>
    %56 = arith.addf %42, %55 : vector<8x128xf32>
    %c0_46 = arith.constant 0 : index
    %c2_47 = arith.constant 2 : index
    %c0_48 = arith.constant 0 : index
    %c0_49 = arith.constant 0 : index
    %57 = vector.load %arg8[%c0_46, %c2_47, %c0_48, %c0_49] : memref<1x3x8x128xf32, #tpu.memory_space<vmem>>, vector<1x1x8x128xf32>
    %58 = vector.shape_cast %57 : vector<1x1x8x128xf32> to vector<8x128xf32>
    %59 = vector.shape_cast %56 : vector<8x128xf32> to vector<1x1x8x128xf32>
    tpu.vector_store %arg8[%c0_46, %c2_47, %c0_48, %c0_49], %59 {strides = array<i32>} : memref<1x3x8x128xf32, #tpu.memory_space<vmem>>, vector<1x1x8x128xf32>,
    return
  }
  func.func @transform_0(%arg0: i32, %arg1: i32) -> (i32, i32, i32) {
    %c1_i32 = arith.constant 1 : i32
    %0 = arith.muli %arg0, %c1_i32 : i32
    %1 = arith.addi %0, %arg1 : i32
    %c0_i32 = arith.constant 0 : i32
    %c0_i32_0 = arith.constant 0 : i32
    %c0_i32_1 = arith.constant 0 : i32
    return %1, %c0_i32, %c0_i32_0 : i32, i32, i32
  }
  func.func @transform_1(%arg0: i32, %arg1: i32) -> (i32, i32, i32) {
    %c1_i32 = arith.constant 1 : i32
    %0 = arith.muli %arg0, %c1_i32 : i32
    %1 = arith.addi %0, %arg1 : i32
    %c0_i32 = arith.constant 0 : i32
    %c0_i32_0 = arith.constant 0 : i32
    %c0_i32_1 = arith.constant 0 : i32
    return %1, %c0_i32, %c0_i32_0 : i32, i32, i32
  }
  func.func @transform_2(%arg0: i32, %arg1: i32) -> (i32, i32, i32) {
    %c1_i32 = arith.constant 1 : i32
    %0 = arith.muli %arg0, %c1_i32 : i32
    %1 = arith.addi %0, %arg1 : i32
    %c0_i32 = arith.constant 0 : i32
    %c0_i32_0 = arith.constant 0 : i32
    %c0_i32_1 = arith.constant 0 : i32
    return %1, %c0_i32, %c0_i32_0 : i32, i32, i32
  }
  func.func @transform_3(%arg0: i32, %arg1: i32) -> (i32, i32, i32) {
    %c1_i32 = arith.constant 1 : i32
    %0 = arith.muli %arg0, %c1_i32 : i32
    %1 = arith.addi %0, %arg1 : i32
    %c0_i32 = arith.constant 0 : i32
    %c0_i32_0 = arith.constant 0 : i32
    %c0_i32_1 = arith.constant 0 : i32
    return %1, %c0_i32, %c0_i32_0 : i32, i32, i32
  }
  func.func @transform_4(%arg0: i32, %arg1: i32) -> (i32, i32, i32) {
    %c1_i32 = arith.constant 1 : i32
    %0 = arith.muli %arg0, %c1_i32 : i32
    %1 = arith.addi %0, %arg1 : i32
    %c0_i32 = arith.constant 0 : i32
    %c0_i32_0 = arith.constant 0 : i32
    %c0_i32_1 = arith.constant 0 : i32
    return %1, %c0_i32, %c0_i32_0 : i32, i32, i32
  }
  func.func @transform_5(%arg0: i32, %arg1: i32) -> (i32, i32, i32) {
    %c1_i32 = arith.constant 1 : i32
    %0 = arith.muli %arg0, %c1_i32 : i32
    %1 = arith.addi %0, %arg1 : i32
    %c0_i32 = arith.constant 0 : i32
    %c0_i32_0 = arith.constant 0 : i32
    %c0_i32_1 = arith.constant 0 : i32
    return %1, %c0_i32, %c0_i32_0 : i32, i32, i32
  }
  func.func @transform_6(%arg0: i32, %arg1: i32) -> (i32, i32, i32, i32) {
    %c0_i32 = arith.constant 0 : i32
    %c0_i32_0 = arith.constant 0 : i32
    %c0_i32_1 = arith.constant 0 : i32
    %c0_i32_2 = arith.constant 0 : i32
    return %arg0, %c0_i32, %c0_i32_0, %c0_i32_1 : i32, i32, i32, i32
  }
}

</mosaic_0001>

<llo_original>
// kernel: tpu_custom_call.1
$region0: #{tpu_custom_call.1}
  #allocation0 [shape = 'u32[]', space=smem, size = 0x4, offset = 0x4, fixed_abs, tag = 'smem constant byte address 0x4 - core index']
  #allocation1 [shape = 'u32[144,128]{1,0:T(1,128)}', space=vmem, size = 0x12000, scoped, tag = 'internal scratch']
  %s0 = inlined_call_operand.hbm [shape: f32[2,8,128], index: 0, kind: input, shape index: {}]
  %s1 = inlined_call_operand.hbm [shape: f32[2,8,128], index: 1, kind: input, shape index: {}]
  %s2 = inlined_call_operand.hbm [shape: f32[2,8,128], index: 2, kind: input, shape index: {}]
  %s3 = inlined_call_operand.hbm [shape: f32[2,8,128], index: 3, kind: input, shape index: {}]
  %s4 = inlined_call_operand.hbm [shape: f32[2,8,128], index: 4, kind: input, shape index: {}]
  %s5 = inlined_call_operand.vmem [shape: f32[2,8,128], index: 5, kind: input, shape index: {}]
  %s6 = inlined_call_operand.hbm [shape: f32[1,3,8,128], index: 6, kind: output, shape index: {}]
  %s7 = sld [smem:[#allocation0]]
  $region58: #{tpu_custom_call.1} parent=0
    _
  %s9 = ssub.s32 1, %s7
  %s10 = scalar_select 0, %s9, %s7
  $region1: #{tpu_custom_call.1} parent=0
    #allocation2 [shape = 'u8[8192]{0}', space=vmem, size = 0x2000, scoped, tag = 'input window, operand 0, single buffered']
    #allocation3 [shape = 's32[1]{0}', space=sflag, size = 0x4, scoped, tag = 'scoped memory for tpu_custom_call.1']
    #allocation4 [shape = 's32[1]{0}', space=sflag, size = 0x4, scoped, tag = 'scoped memory for tpu_custom_call.1']
    #allocation5 [shape = 'u8[8192]{0}', space=vmem, size = 0x2000, scoped, tag = 'input window, operand 1, single buffered']
    #allocation6 [shape = 's32[1]{0}', space=sflag, size = 0x4, scoped, tag = 'scoped memory for tpu_custom_call.1']
    #allocation7 [shape = 'u8[8192]{0}', space=vmem, size = 0x2000, scoped, tag = 'input window, operand 2, single buffered']
    #allocation8 [shape = 'u8[8192]{0}', space=vmem, size = 0x2000, scoped, tag = 'input window, operand 3, single buffered']
    #allocation9 [shape = 's32[1]{0}', space=sflag, size = 0x4, scoped, tag = 'scoped memory for tpu_custom_call.1']
    #allocation10 [shape = 'u8[8192]{0}', space=vmem, size = 0x2000, scoped, tag = 'input window, operand 4, single buffered']
    #allocation11 [shape = 'u8[12288]{0}', space=vmem, size = 0x3000, scoped, tag = 'output window, operand 0, single buffered']
    %11 = vsyncpa [#allocation3], 0
    %12 = vsyncpa [#allocation6], 0
    %13 = vsyncpa [#allocation9], 0
    %14 = vsyncpa [#allocation4], 0
    // Predicated region
    $region2: #{tpu_custom_call.1} parent=1 // pred_check
      _
    $region3: #{tpu_custom_call.1} parent=1 // pred_check_branch
      %16 = sbr.rel (0) target = $region5
    $region4: #{tpu_custom_call.1} parent=1 // pred_region
      %s17 = sadd.s32 0, 0
      %s18 = smul.u32 2, %s17
      %s20 = ssub.s32 256, 256
      %21 = vsyncadd [#allocation3], %s20
      %s22 = smul.addr %s18, 128
      %s23 = scalar_lea.hbm %s0, %s22
      %s24 = sshll.u32 [#allocation2], 4
      %s25 = int_to_ptr.vmem [resolvable:$true] %s24
      %30 = dma.hbm_to_vmem [thread:$0]  %s23, 256, %s25, [#allocation3], 128, 128, 8
    $region5: #{tpu_custom_call.1} parent=1 // pred_fallthru
      _
    // Predicated region
    $region6: #{tpu_custom_call.1} parent=1 // pred_check
      _
    $region7: #{tpu_custom_call.1} parent=1 // pred_check_branch
      %32 = sbr.rel (0) target = $region9
    $region8: #{tpu_custom_call.1} parent=1 // pred_region
      %s33 = sadd.s32 0, 0
      %s34 = smul.u32 2, %s33
      %s36 = ssub.s32 256, 256
      %37 = vsyncadd [#allocation6], %s36
      %s38 = smul.addr %s34, 128
      %s39 = scalar_lea.hbm %s1, %s38
      %s40 = sshll.u32 [#allocation5], 4
      %s41 = int_to_ptr.vmem [resolvable:$true] %s40
      %46 = dma.hbm_to_vmem [thread:$0]  %s39, 256, %s41, [#allocation6], 128, 128, 8
    $region9: #{tpu_custom_call.1} parent=1 // pred_fallthru
      _
    // Predicated region
    $region10: #{tpu_custom_call.1} parent=1 // pred_check
      _
    $region11: #{tpu_custom_call.1} parent=1 // pred_check_branch
      %48 = sbr.rel (0) target = $region13
    $region12: #{tpu_custom_call.1} parent=1 // pred_region
      %s49 = sadd.s32 0, 0
      %s50 = smul.u32 2, %s49
      %s52 = ssub.s32 256, 256
      %53 = vsyncadd [#allocation6], %s52
      %s54 = smul.addr %s50, 128
      %s55 = scalar_lea.hbm %s2, %s54
      %s56 = sshll.u32 [#allocation7], 4
      %s57 = int_to_ptr.vmem [resolvable:$true] %s56
      %62 = dma.hbm_to_vmem [thread:$0]  %s55, 256, %s57, [#allocation6], 128, 128, 8
    $region13: #{tpu_custom_call.1} parent=1 // pred_fallthru
      _
    // Predicated region
    $region14: #{tpu_custom_call.1} parent=1 // pred_check
      _
    $region15: #{tpu_custom_call.1} parent=1 // pred_check_branch
      %64 = sbr.rel (0) target = $region17
    $region16: #{tpu_custom_call.1} parent=1 // pred_region
      %s65 = sadd.s32 0, 0
      %s66 = smul.u32 2, %s65
      %s68 = ssub.s32 256, 256
      %69 = vsyncadd [#allocation9], %s68
      %s70 = smul.addr %s66, 128
      %s71 = scalar_lea.hbm %s3, %s70
      %s72 = sshll.u32 [#allocation8], 4
      %s73 = int_to_ptr.vmem [resolvable:$true] %s72
      %78 = dma.hbm_to_vmem [thread:$0]  %s71, 256, %s73, [#allocation9], 128, 128, 8
    $region17: #{tpu_custom_call.1} parent=1 // pred_fallthru
      _
    // Predicated region
    $region18: #{tpu_custom_call.1} parent=1 // pred_check
      _
    $region19: #{tpu_custom_call.1} parent=1 // pred_check_branch
      %80 = sbr.rel (0) target = $region21
    $region20: #{tpu_custom_call.1} parent=1 // pred_region
      %s81 = sadd.s32 0, 0
      %s82 = smul.u32 2, %s81
      %s84 = ssub.s32 256, 256
      %85 = vsyncadd [#allocation9], %s84
      %s86 = smul.addr %s82, 128
      %s87 = scalar_lea.hbm %s4, %s86
      %s88 = sshll.u32 [#allocation10], 4
      %s89 = int_to_ptr.vmem [resolvable:$true] %s88
      %94 = dma.hbm_to_vmem [thread:$0]  %s87, 256, %s89, [#allocation9], 128, 128, 8
    $region21: #{tpu_custom_call.1} parent=1 // pred_fallthru
      _
    // Predicated region
    $region22: #{tpu_custom_call.1} parent=1 // pred_check
      _
    $region23: #{tpu_custom_call.1} parent=1 // pred_check_branch
      %96 = sbr.rel (0) target = $region25
    $region24: #{tpu_custom_call.1} parent=1 // pred_region
      %s97 = sadd.s32 0, 0
      %s98 = smul.u32 2, %s97
      %p99 = scmp.lt.s32.totalorder %s98, 1
      %s100 = scalar_select %p99, %s98, 1
      %s101 = smul.addr %s100, 8
      %s102 = scalar_lea.vmem %s5, %s101
      %s103 = sadd.s32 0, 0
      %s104 = smul.u32 2, %s103
    $region25: #{tpu_custom_call.1} parent=1 // pred_fallthru
      _
    // Predicated region
    $region26: #{tpu_custom_call.1} parent=1 // pred_check
      _
    $region27: #{tpu_custom_call.1} parent=1 // pred_check_branch
      %106 = sbr.rel (0) target = $region29
    $region28: #{tpu_custom_call.1} parent=1 // pred_region
      %107 = dma.done [#allocation3], 256
    $region29: #{tpu_custom_call.1} parent=1 // pred_fallthru
      _
    // Predicated region
    $region30: #{tpu_custom_call.1} parent=1 // pred_check
      _
    $region31: #{tpu_custom_call.1} parent=1 // pred_check_branch
      %109 = sbr.rel (0) target = $region33
    $region32: #{tpu_custom_call.1} parent=1 // pred_region
      %110 = dma.done [#allocation6], 256
    $region33: #{tpu_custom_call.1} parent=1 // pred_fallthru
      _
    // Predicated region
    $region34: #{tpu_custom_call.1} parent=1 // pred_check
      _
    $region35: #{tpu_custom_call.1} parent=1 // pred_check_branch
      %112 = sbr.rel (0) target = $region37
    $region36: #{tpu_custom_call.1} parent=1 // pred_region
      %113 = dma.done [#allocation6], 256
    $region37: #{tpu_custom_call.1} parent=1 // pred_fallthru
      _
    // Predicated region
    $region38: #{tpu_custom_call.1} parent=1 // pred_check
      _
    $region39: #{tpu_custom_call.1} parent=1 // pred_check_branch
      %115 = sbr.rel (0) target = $region41
    $region40: #{tpu_custom_call.1} parent=1 // pred_region
      %116 = dma.done [#allocation9], 256
    $region41: #{tpu_custom_call.1} parent=1 // pred_fallthru
      _
    // Predicated region
    $region42: #{tpu_custom_call.1} parent=1 // pred_check
      _
    $region43: #{tpu_custom_call.1} parent=1 // pred_check_branch
      %118 = sbr.rel (0) target = $region45
    $region44: #{tpu_custom_call.1} parent=1 // pred_region
      %119 = dma.done [#allocation9], 256
    $region45: #{tpu_custom_call.1} parent=1 // pred_fallthru
      _
    %s120 = sadd.s32 0, 0
    %s121 = smul.u32 2, %s120
    %p122 = scmp.lt.s32.totalorder %s121, 1
    %s123 = scalar_select %p122, %s121, 1
    %s124 = smul.addr %s123, 8
    %s125 = scalar_lea.vmem %s5, %s124
    %s126 = sadd.s32 0, 0
    %s127 = smul.u32 2, %s126
    %s128 = sadd.s32 0, 0
    %s129 = smul.u32 2, %s128
    %s130 = sadd.s32 0, 0
    %s131 = smul.u32 2, %s130
    %s132 = sadd.s32 0, 0
    %s133 = smul.u32 2, %s132
    %s134 = sadd.s32 0, 0
    %s135 = smul.u32 2, %s134
    %s136 = sadd.s32 0, 0
    %s137 = smul.u32 2, %s136
    %p138 = scmp.lt.s32.totalorder %s137, 1
    %s139 = scalar_select %p138, %s137, 1
    %s140 = smul.addr %s139, 8
    %s141 = scalar_lea.vmem %s5, %s140
    %s142 = sadd.s32 0, 0
    %s143 = smul.u32 2, %s142
    %p144 = scmp.eq.s32.totalorder 0, 0
    // Predicated region
    $region46: #{tpu_custom_call.1} parent=1 // pred_check
      %p145 = pneg %p144
    $region47: #{tpu_custom_call.1} parent=1 // pred_check_branch
      %147 = sbr.rel (%p145) target = $region49
    $region48: #{tpu_custom_call.1} parent=1 // pred_region
      %148 = vst [vmem:[#allocation11] sm:$0xff] 0.0
      %149 = vst [vmem:[#allocation11 + $0x8] sm:$0xff] 0.0
      %150 = vst [vmem:[#allocation11 + $0x10] sm:$0xff] 0.0
    $region49: #{tpu_custom_call.1} parent=1 // pred_fallthru
      _
    %v151 = vld [vmem:[#allocation11] sm:$0xff]
    %v152 = vld [vmem:[#allocation2] sm:$0xff]
    %v153 = vld [vmem:[#allocation2 + $0x8] sm:$0xff]
    %v154 = vld [vmem:[#allocation5] sm:$0xff]
    %v155 = vld [vmem:[#allocation5 + $0x8] sm:$0xff]
    %v156 = vmax.f32 %v152, 0.0
    %v157 = vmax.f32 %v153, 0.0
    %v158 = vmul.f32 %v152, %v154
    %v159 = vmul.f32 %v153, %v155
    %v160 = vsub.f32 %v156, %v158
    %v161 = vsub.f32 %v157, %v159
    %v162 = vand.u32 2147483647, %v152
    %v163 = vand.u32 2147483647, %v153
    %v164 = vsub.f32 0.0, %v162
    %v165 = vsub.f32 0.0, %v163
    %v166 = vmul.f32 %v164, 1.442695
    %v167 = vpow.pop %v166
    %v168 = vmul.f32 %v165, 1.442695
    %v169 = vpow.pop %v168
    %v170 = vadd.f32 %v167, 1.0
    %v171 = vlog2.pop %v170
    %v172 = vmul.f32 %v171, 0.6931472
    %v173 = vmul.f32 -0.5, %v167
    %v174 = vadd.f32 %v173, 1.0
    %v175 = vmul.f32 %v174, %v167
    %v176 = vand.u32 2147483647, %v167
    %vm177 = vcmp.lt.f32.partialorder %v176, 0.0004427343
    %v178 = vsel %vm177, %v175, %v172
    %v179 = vadd.f32 %v169, 1.0
    %v180 = vlog2.pop %v179
    %v181 = vmul.f32 %v180, 0.6931472
    %v182 = vmul.f32 -0.5, %v169
    %v183 = vadd.f32 %v182, 1.0
    %v184 = vmul.f32 %v183, %v169
    %v185 = vand.u32 2147483647, %v169
    %vm186 = vcmp.lt.f32.partialorder %v185, 0.0004427343
    %v187 = vsel %vm186, %v184, %v181
    %v188 = vadd.f32 %v160, %v178
    %v189 = vadd.f32 %v161, %v187
    %v190 = vadd.f32 %v188, %v189
    %v191 = vadd.f32 %v151, %v190
    %192 = vst [vmem:[#allocation11] sm:$0xff] %v191
    %s193 = scalar_lea.vmem [#allocation11], 8
    %v194 = vld [vmem:[%s193] sm:$0xff]
    %v195 = vld [vmem:[#allocation7] sm:$0xff]
    %v196 = vld [vmem:[#allocation7 + $0x8] sm:$0xff]
    %v197 = vld [vmem:[#allocation8] sm:$0xff]
    %v198 = vld [vmem:[#allocation8 + $0x8] sm:$0xff]
    %v199 = vsub.f32 %v195, %v197
    %v200 = vsub.f32 %v196, %v198
    %v201 = vand.u32 2147483647, %v199
    %v202 = vand.u32 2147483647, %v200
    %vm203 = vcmp.lt.f32.partialorder %v201, 1.0
    %vm204 = vcmp.lt.f32.partialorder %v202, 1.0
    %v205 = vmul.f32 %v199, 0.5
    %v206 = vmul.f32 %v200, 0.5
    %v207 = vmul.f32 %v205, %v199
    %v208 = vmul.f32 %v206, %v200
    %v209 = vsub.f32 %v201, 0.5
    %v210 = vsub.f32 %v202, 0.5
    %v211 = vsel %vm203, %v207, %v209
    %v212 = vsel %vm204, %v208, %v210
    %v213 = vadd.f32 %v211, %v212
    %v214 = vadd.f32 %v194, %v213
    %215 = vst [vmem:[%s193] sm:$0xff] %v214
    %s216 = scalar_lea.vmem [#allocation11], 16
    %v217 = vld [vmem:[%s216] sm:$0xff]
    %v218 = vld [vmem:[#allocation10] sm:$0xff]
    %v219 = vld [vmem:[#allocation10 + $0x8] sm:$0xff]
    %v220 = vld [vmem:[%s141] sm:$0xff]
    %v221 = vld [vmem:[%s141 + $0x8] sm:$0xff]
    %v222 = vsub.f32 %v218, %v220
    %v223 = vsub.f32 %v219, %v221
    %v224 = vand.u32 2147483647, %v222
    %v225 = vand.u32 2147483647, %v223
    %vm226 = vcmp.lt.f32.partialorder %v224, 1.0
    %vm227 = vcmp.lt.f32.partialorder %v225, 1.0
    %v228 = vmul.f32 %v222, 0.5
    %v229 = vmul.f32 %v223, 0.5
    %v230 = vmul.f32 %v228, %v222
    %v231 = vmul.f32 %v229, %v223
    %v232 = vsub.f32 %v224, 0.5
    %v233 = vsub.f32 %v225, 0.5
    %v234 = vsel %vm226, %v230, %v232
    %v235 = vsel %vm227, %v231, %v233
    %v236 = vadd.f32 %v234, %v235
    %v237 = vadd.f32 %v217, %v236
    %238 = vst [vmem:[%s216] sm:$0xff] %v237
    // Predicated region
    $region50: #{tpu_custom_call.1} parent=1 // pred_check
      _
    $region51: #{tpu_custom_call.1} parent=1 // pred_check_branch
      %240 = sbr.rel (0) target = $region53
    $region52: #{tpu_custom_call.1} parent=1 // pred_region
      %s242 = ssub.s32 384, 384
      %243 = vsyncadd [#allocation4], %s242
      %s244 = sshll.u32 [#allocation11], 4
      %s245 = int_to_ptr.vmem [resolvable:$true] %s244
      %250 = dma.vmem_to_hbm [thread:$0]  %s245, 384, %s6, [#allocation4], 128, 128, 8
    $region53: #{tpu_custom_call.1} parent=1 // pred_fallthru
      _
    // Predicated region
    $region54: #{tpu_custom_call.1} parent=1 // pred_check
      _
    $region55: #{tpu_custom_call.1} parent=1 // pred_check_branch
      %252 = sbr.rel (0) target = $region57
    $region56: #{tpu_custom_call.1} parent=1 // pred_region
      %253 = dma.done [#allocation4], 384
    $region57: #{tpu_custom_call.1} parent=1 // pred_fallthru
      _
    %254 = vsyncpa [#allocation3], 1
    %255 = vsyncpa [#allocation6], 1
    %256 = vsyncpa [#allocation9], 1
    %257 = vsyncpa [#allocation4], 1

</llo_original>
